<compile_context>
chip_gen: v7x
topology: tpu7x:2x2x1
jax: 0.10.0
libtpu: 0.0.40
codegen_flags: <defaults>
</compile_context>

<pallas_src>
import jax
import jax.numpy as jnp
from jax.experimental import pallas as pl
from jax.experimental.pallas import tpu as pltpu


def qkv_fused_kernel(x_ref, w_ref, b_ref, o_ref, acc_ref):
    # x_ref  : (tm, tk)   row/K tile of flattened input
    # w_ref  : (tk, tn)   tile of the fused weight (W^T contracted with S)
    # b_ref  : (1,  tn)   fused bias tile (f32)
    # o_ref  : (tm, tn)   output tile
    # acc_ref: (tm, tn)   f32 accumulator resident across the K grid axis
    @pl.when(pl.program_id(2) == 0)
    def _init():
        acc_ref[...] = jnp.zeros_like(acc_ref)

    acc_ref[...] += jnp.dot(
        x_ref[...], w_ref[...], preferred_element_type=jnp.float32
    )

    @pl.when(pl.program_id(2) == pl.num_programs(2) - 1)
    def _finalize():
        # Bias add kept out of the reduction loop (single broadcast per tile).
        o_ref[...] = (acc_ref[...] + b_ref[...]).astype(o_ref.dtype)


def _round_up(x, m):
    return ((x + m - 1) // m) * m


def _pick_tile(dim, candidates):
    """Largest candidate that evenly divides `dim`; else full extent."""
    for c in candidates:
        if dim >= c and dim % c == 0:
            return c
    return dim


def qkv_linear(x, w_v, b_v, s_weight, num_heads, head_dim, *,
               row_tile=256, compute_dtype=None):
    """x: (B, S, hidden); w_v: (H*D, hidden) torch-style Linear weight;
    b_v: (H*D,); s_weight: (H*D, D) torch-style singular_value.weight.

    compute_dtype: dtype for the GEMM inputs (e.g. jnp.bfloat16). Defaults to
    x.dtype. Accumulation is always f32.
    """
    B, S, hidden = x.shape
    H, D = num_heads, head_dim
    N = H * D
    K = hidden
    M = B * S

    out_dtype = x.dtype
    if compute_dtype is None:
        compute_dtype = x.dtype

    # ---- Fuse the two linear maps in the wrapper (exact: dropout is identity).
    s3d = s_weight.reshape(H, D, D).astype(jnp.float32)           # (H, D, D)
    wt_f32 = w_v.T.astype(jnp.float32)                            # (K, H*D)
    w_fused = jnp.einsum(
        "khd,hde->khe", wt_f32.reshape(K, H, D), s3d,
        preferred_element_type=jnp.float32,
    ).reshape(K, N).astype(compute_dtype)
    b_fused = jnp.einsum(
        "hd,hde->he", b_v.reshape(H, D).astype(jnp.float32), s3d,
        preferred_element_type=jnp.float32,
    ).reshape(1, N)                                               # keep f32

    x2d = x.reshape(M, K).astype(compute_dtype)

    # ---- Tiling. Rows: fixed tile (pipelining + megacore); pad ragged M.
    tm = row_tile if M >= row_tile else _round_up(M, 8)
    m_pad = _round_up(M, tm)
    if m_pad != M:
        x2d = jnp.pad(x2d, ((0, m_pad - M), (0, 0)))

    # K / N tiles: keep VMEM per step small (fits v7x's 64 MiB comfortably).
    tk = _pick_tile(K, (512, 256, 128))
    tn = _pick_tile(N, (512, 256, 128))
    # NOTE: for real models N = H*D should be a multiple of 128 so the output
    # tile stays lane-dense (unmasked vector stores).

    grid = (m_pad // tm, N // tn, K // tk)

    out2d = pl.pallas_call(
        qkv_fused_kernel,
        out_shape=jax.ShapeDtypeStruct((m_pad, N), out_dtype),
        grid_spec=pltpu.PrefetchScalarGridSpec(
            num_scalar_prefetch=0,
            grid=grid,
            in_specs=[
                pl.BlockSpec((tm, tk), lambda i, j, k: (i, k)),
                pl.BlockSpec((tk, tn), lambda i, j, k: (k, j)),
                pl.BlockSpec((1, tn), lambda i, j, k: (0, j)),
            ],
            out_specs=pl.BlockSpec((tm, tn), lambda i, j, k: (i, j)),
            scratch_shapes=[pltpu.VMEM((tm, tn), jnp.float32)],
        ),
        compiler_params=pltpu.CompilerParams(
            dimension_semantics=("parallel", "parallel", "arbitrary"),
        ),
    )(x2d, w_fused, b_fused)

    if m_pad != M:
        out2d = out2d[:M]
    return out2d.reshape(B, S, N)


def qkv_linear_ref(x, w_v, b_v, s_weight, num_heads, head_dim):
    """Pure-JAX reference mirroring the PyTorch forward (eval-mode dropout)."""
    B, S, _ = x.shape
    H, D = num_heads, head_dim
    y = jnp.einsum("bsk,nk->bsn", x, w_v) + b_v           # nn.Linear
    y = y.reshape(B, S, H, D)
    sv = s_weight.reshape(H, D, D)
    out = jnp.einsum("bshd,hde->bshe", y, sv)
    return out.reshape(B, S, H * D)


if __name__ == "__main__":
    # Small shapes consistent with the module's forward.
    B, S = 2, 8
    hidden = 32
    num_heads, head_dim = 2, 16
    N = num_heads * head_dim

    key = jax.random.PRNGKey(0)
    kx, kw, kb, ks = jax.random.split(key, 4)
    x = jax.random.normal(kx, (B, S, hidden), dtype=jnp.float32)
    w_v = jax.random.normal(kw, (N, hidden), dtype=jnp.float32) * 0.1   # torch Linear weight (out, in)
    b_v = jax.random.normal(kb, (N,), dtype=jnp.float32) * 0.1
    s_weight = jax.random.normal(ks, (N, head_dim), dtype=jnp.float32) * 0.1

    out = qkv_linear(x, w_v, b_v, s_weight, num_heads, head_dim)
    out = jax.block_until_ready(out)

    ref = qkv_linear_ref(x, w_v, b_v, s_weight, num_heads, head_dim)
    assert out.shape == (B, S, N)
    assert jnp.allclose(out, ref, atol=2e-4, rtol=2e-4), "mismatch vs reference"

    # Second check: ragged M (exercises the row-padding path).
    B2, S2 = 3, 5
    x2 = jax.random.normal(jax.random.PRNGKey(1), (B2, S2, hidden), dtype=jnp.float32)
    out2 = jax.block_until_ready(
        qkv_linear(x2, w_v, b_v, s_weight, num_heads, head_dim)
    )
    ref2 = qkv_linear_ref(x2, w_v, b_v, s_weight, num_heads, head_dim)
    assert out2.shape == (B2, S2, N)
    assert jnp.allclose(out2, ref2, atol=2e-4, rtol=2e-4), "mismatch vs reference (ragged M)"

    print("KERNEL_OK")
</pallas_src>

<mosaic_0001>
module attributes {stable_mosaic.version = 11 : i64} {
  func.func @qkv_fused_kernel(%arg0: i32, %arg1: i32, %arg2: i32, %arg3: memref<16x32xf32, #tpu.memory_space<vmem>>, %arg4: memref<32x32xf32, #tpu.memory_space<vmem>>, %arg5: memref<1x32xf32, #tpu.memory_space<vmem>>, %arg6: memref<16x32xf32, #tpu.memory_space<vmem>>, %arg7: memref<16x32xf32, #tpu.memory_space<vmem>>) attributes {dimension_semantics = [#tpu.dimension_semantics<parallel>, #tpu.dimension_semantics<parallel>, #tpu.dimension_semantics<arbitrary>], iteration_bounds = array<i64: 1, 1, 1>, scalar_prefetch = 0 : i64, scratch_operands = 1 : i64, tpu.core_type = #tpu.core_type<tc>, window_params = [{transform_indices = @transform_0, window_bounds = array<i64: 16, 32>}, {transform_indices = @transform_1, window_bounds = array<i64: 32, 32>}, {transform_indices = @transform_2, window_bounds = array<i64: 1, 32>}, {transform_indices = @transform_3, window_bounds = array<i64: 16, 32>}]} {
    %c0_i32 = arith.constant 0 : i32
    %0 = arith.cmpi eq, %arg2, %c0_i32 : i32
    %1 = arith.extui %0 : i1 to i32
    %c0_i32_0 = arith.constant 0 : i32
    %2 = arith.cmpi ne, %1, %c0_i32_0 : i32
    scf.if %2 {
      %cst_10 = arith.constant 0.000000e+00 : f32
      %12 = vector.broadcast %cst_10 : f32 to vector<16x32xf32>
      %c0_11 = arith.constant 0 : index
      %c0_12 = arith.constant 0 : index
      %13 = vector.load %arg7[%c0_11, %c0_12] : memref<16x32xf32, #tpu.memory_space<vmem>>, vector<16x32xf32>
      tpu.vector_store %arg7[%c0_11, %c0_12], %12 {strides = array<i32>} : memref<16x32xf32, #tpu.memory_space<vmem>>, vector<16x32xf32>,
    } else {
    }
    %c0 = arith.constant 0 : index
    %c0_1 = arith.constant 0 : index
    %3 = vector.load %arg7[%c0, %c0_1] : memref<16x32xf32, #tpu.memory_space<vmem>>, vector<16x32xf32>
    %c0_2 = arith.constant 0 : index
    %c0_3 = arith.constant 0 : index
    %4 = vector.load %arg3[%c0_2, %c0_3] : memref<16x32xf32, #tpu.memory_space<vmem>>, vector<16x32xf32>
    %c0_4 = arith.constant 0 : index
    %c0_5 = arith.constant 0 : index
    %5 = vector.load %arg4[%c0_4, %c0_5] : memref<32x32xf32, #tpu.memory_space<vmem>>, vector<32x32xf32>
    %cst = arith.constant dense<0.000000e+00> : vector<16x32xf32>
    %6 = tpu.matmul %4, %5, %cst {dimension_numbers = #tpu.dot_dimension_numbers<[1], [0], [0], [1], [0, 0, 1, 1], [], []>} : vector<16x32xf32>, vector<32x32xf32>, vector<16x32xf32> -> vector<16x32xf32>
    %7 = arith.addf %3, %6 : vector<16x32xf32>
    %c0_6 = arith.constant 0 : index
    %c0_7 = arith.constant 0 : index
    %8 = vector.load %arg7[%c0_6, %c0_7] : memref<16x32xf32, #tpu.memory_space<vmem>>, vector<16x32xf32>
    tpu.vector_store %arg7[%c0_6, %c0_7], %7 {strides = array<i32>} : memref<16x32xf32, #tpu.memory_space<vmem>>, vector<16x32xf32>,
    %c0_i32_8 = arith.constant 0 : i32
    %9 = arith.cmpi eq, %arg2, %c0_i32_8 : i32
    %10 = arith.extui %9 : i1 to i32
    %c0_i32_9 = arith.constant 0 : i32
    %11 = arith.cmpi ne, %10, %c0_i32_9 : i32
    scf.if %11 {
      %c0_10 = arith.constant 0 : index
      %c0_11 = arith.constant 0 : index
      %12 = vector.load %arg7[%c0_10, %c0_11] : memref<16x32xf32, #tpu.memory_space<vmem>>, vector<16x32xf32>
      %c0_12 = arith.constant 0 : index
      %c0_13 = arith.constant 0 : index
      %13 = vector.load %arg5[%c0_12, %c0_13] : memref<1x32xf32, #tpu.memory_space<vmem>>, vector<1x32xf32>
      %14 = vector.broadcast %13 : vector<1x32xf32> to vector<16x32xf32>
      %15 = arith.addf %12, %14 : vector<16x32xf32>
      %c0_14 = arith.constant 0 : index
      %c0_15 = arith.constant 0 : index
      %16 = vector.load %arg6[%c0_14, %c0_15] : memref<16x32xf32, #tpu.memory_space<vmem>>, vector<16x32xf32>
      tpu.vector_store %arg6[%c0_14, %c0_15], %15 {strides = array<i32>} : memref<16x32xf32, #tpu.memory_space<vmem>>, vector<16x32xf32>,
    } else {
    }
    return
  }
  func.func @transform_0(%arg0: i32, %arg1: i32, %arg2: i32) -> (i32, i32) {
    %c0_i32 = arith.constant 0 : i32
    return %arg0, %arg2 : i32, i32
  }
  func.func @transform_1(%arg0: i32, %arg1: i32, %arg2: i32) -> (i32, i32) {
    %c0_i32 = arith.constant 0 : i32
    return %arg2, %arg1 : i32, i32
  }
  func.func @transform_2(%arg0: i32, %arg1: i32, %arg2: i32) -> (i32, i32) {
    %c0_i32 = arith.constant 0 : i32
    %c0_i32_0 = arith.constant 0 : i32
    return %c0_i32, %arg1 : i32, i32
  }
  func.func @transform_3(%arg0: i32, %arg1: i32, %arg2: i32) -> (i32, i32) {
    %c0_i32 = arith.constant 0 : i32
    return %arg0, %arg1 : i32, i32
  }
}

</mosaic_0001>

<llo_original>
// kernel: tpu_custom_call.1
$region0: #{tpu_custom_call.1}
  #allocation0 [shape = 'u32[]', space=smem, size = 0x4, offset = 0x4, fixed_abs, tag = 'smem constant byte address 0x4 - core index']
  #allocation1 [shape = 'u32[144,128]{1,0:T(1,128)}', space=vmem, size = 0x12000, scoped, tag = 'internal scratch']
  #allocation2 [shape = 'f32[16,32]{1,0:T(8,128)}', space=vmem, size = 0x2000, scoped, tag = 'scratch operand']
  %s0 = inlined_call_operand.hbm [shape: f32[16,32], index: 0, kind: input, shape index: {}]
  %s1 = inlined_call_operand.hbm [shape: f32[32,32], index: 1, kind: input, shape index: {}]
  %s2 = inlined_call_operand.vmem [shape: f32[1,32], index: 2, kind: input, shape index: {}]
  %s3 = inlined_call_operand.hbm [shape: f32[16,32], index: 3, kind: output, shape index: {}]
  %s4 = sld [smem:[#allocation0]]
  $region38: #{tpu_custom_call.1} parent=0
    _
  %s6 = ssub.s32 1, %s4
  %s7 = scalar_select 0, %s6, %s4
  $region1: #{tpu_custom_call.1} parent=0
    #allocation3 [shape = 'u8[8192]{0}', space=vmem, size = 0x2000, scoped, tag = 'input window, operand 0, single buffered']
    #allocation4 [shape = 's32[1]{0}', space=sflag, size = 0x4, scoped, tag = 'scoped memory for tpu_custom_call.1']
    #allocation5 [shape = 's32[1]{0}', space=sflag, size = 0x4, scoped, tag = 'scoped memory for tpu_custom_call.1']
    #allocation6 [shape = 'u8[16384]{0}', space=vmem, size = 0x4000, scoped, tag = 'input window, operand 1, single buffered']
    #allocation7 [shape = 's32[1]{0}', space=sflag, size = 0x4, scoped, tag = 'scoped memory for tpu_custom_call.1']
    #allocation8 [shape = 'u8[8192]{0}', space=vmem, size = 0x2000, scoped, tag = 'output window, operand 0, single buffered']
    %8 = vsyncpa [#allocation4], 0
    %9 = vsyncpa [#allocation7], 0
    %10 = vsyncpa [#allocation5], 0
    // Predicated region
    $region2: #{tpu_custom_call.1} parent=1 // pred_check
      _
    $region3: #{tpu_custom_call.1} parent=1 // pred_check_branch
      %12 = sbr.rel (0) target = $region5
    $region4: #{tpu_custom_call.1} parent=1 // pred_region
      %s14 = ssub.s32 256, 256
      %15 = vsyncadd [#allocation4], %s14
      %s16 = sshll.u32 [#allocation3], 4
      %s17 = int_to_ptr.vmem [resolvable:$true] %s16
      %22 = dma.hbm_to_vmem [thread:$0]  %s0, 256, %s17, [#allocation4], 128, 128, 8
    $region5: #{tpu_custom_call.1} parent=1 // pred_fallthru
      _
    // Predicated region
    $region6: #{tpu_custom_call.1} parent=1 // pred_check
      _
    $region7: #{tpu_custom_call.1} parent=1 // pred_check_branch
      %24 = sbr.rel (0) target = $region9
    $region8: #{tpu_custom_call.1} parent=1 // pred_region
      %s26 = ssub.s32 512, 512
      %27 = vsyncadd [#allocation7], %s26
      %s28 = sshll.u32 [#allocation6], 4
      %s29 = int_to_ptr.vmem [resolvable:$true] %s28
      %34 = dma.hbm_to_vmem [thread:$0]  %s1, 512, %s29, [#allocation7], 128, 128, 8
    $region9: #{tpu_custom_call.1} parent=1 // pred_fallthru
      _
    // Predicated region
    $region10: #{tpu_custom_call.1} parent=1 // pred_check
      _
    $region11: #{tpu_custom_call.1} parent=1 // pred_check_branch
      %36 = sbr.rel (0) target = $region13
    $region12: #{tpu_custom_call.1} parent=1 // pred_region
      _
    $region13: #{tpu_custom_call.1} parent=1 // pred_fallthru
      _
    // Predicated region
    $region14: #{tpu_custom_call.1} parent=1 // pred_check
      _
    $region15: #{tpu_custom_call.1} parent=1 // pred_check_branch
      %38 = sbr.rel (0) target = $region17
    $region16: #{tpu_custom_call.1} parent=1 // pred_region
      %39 = dma.done [#allocation4], 256
    $region17: #{tpu_custom_call.1} parent=1 // pred_fallthru
      _
    // Predicated region
    $region18: #{tpu_custom_call.1} parent=1 // pred_check
      _
    $region19: #{tpu_custom_call.1} parent=1 // pred_check_branch
      %41 = sbr.rel (0) target = $region21
    $region20: #{tpu_custom_call.1} parent=1 // pred_region
      %42 = dma.done [#allocation7], 512
    $region21: #{tpu_custom_call.1} parent=1 // pred_fallthru
      _
    %p43 = scmp.eq.s32.totalorder 0, 0
    // Predicated region
    $region22: #{tpu_custom_call.1} parent=1 // pred_check
      %p44 = pneg %p43
    $region23: #{tpu_custom_call.1} parent=1 // pred_check_branch
      %46 = sbr.rel (%p44) target = $region25
    $region24: #{tpu_custom_call.1} parent=1 // pred_region
      %vm47 = vcmask 261120
      %48 = vst.msk [vmem:[#allocation2] sm:$0xff] %vm47, 0.0
      %49 = vst.msk [vmem:[#allocation2 + $0x8] sm:$0xff] %vm47, 0.0
    $region25: #{tpu_custom_call.1} parent=1 // pred_fallthru
      _
    %v50 = vld [vmem:[#allocation2] sm:$0xff]
    %v51 = vld [vmem:[#allocation2 + $0x8] sm:$0xff]
    %v52 = vld [vmem:[#allocation3] sm:$0xff]
    %v53 = vld [vmem:[#allocation3 + $0x8] sm:$0xff]
    %v54 = vld [vmem:[#allocation6] sm:$0xff]
    %v55 = vld [vmem:[#allocation6 + $0x8] sm:$0xff]
    %v56 = vld [vmem:[#allocation6 + $0x10] sm:$0xff]
    %v57 = vld [vmem:[#allocation6 + $0x18] sm:$0xff]
    %vm58 = vcmask 261120
    %v60 = vsel %vm58, %v52, 0
    %v63 = vsel %vm58, %v53, 0
    %65 = vmatprep.subr.mxu0 0.0
    %66 = vmatpush1.msra.mxu0 %v54
    %67 = vmatprep.subr.mxu0 0.0
    %68 = vmatpush1.msra.mxu0 %v55
    %69 = vmatprep.subr.mxu0 0.0
    %70 = vmatpush1.msra.mxu0 %v56
    %71 = vmatprep.subr.mxu0 0.0
    %72 = vmatpush1.msra.mxu0 %v57
    %73 = vmatprep.subr.mxu0 0.0
    %74 = vmatpush1.msra.mxu0 0.0
    %75 = vmatprep.subr.mxu0 0.0
    %76 = vmatpush1.msra.mxu0 0.0
    %77 = vmatprep.subr.mxu0 0.0
    %78 = vmatpush1.msra.mxu0 0.0
    %79 = vmatprep.subr.mxu0 0.0
    %80 = vmatpush1.msra.mxu0 0.0
    %81 = vmatprep.subr.mxu0 0.0
    %82 = vmatpush1.msra.mxu0 0.0
    %83 = vmatprep.subr.mxu0 0.0
    %84 = vmatpush1.msra.mxu0 0.0
    %85 = vmatprep.subr.mxu0 0.0
    %86 = vmatpush1.msra.mxu0 0.0
    %87 = vmatprep.subr.mxu0 0.0
    %88 = vmatpush1.msra.mxu0 0.0
    %89 = vmatprep.subr.mxu0 0.0
    %90 = vmatpush1.msra.mxu0 0.0
    %91 = vmatprep.subr.mxu0 0.0
    %92 = vmatpush1.msra.mxu0 0.0
    %93 = vmatprep.subr.mxu0 0.0
    %94 = vmatpush1.msra.mxu0 0.0
    %95 = vmatprep.subr.mxu0 0.0
    %96 = vmatpush1.msra.mxu0 0.0
    %97 = vmatprep.subr.mxu0 0.0
    %98 = vmatpush1.msra.mxu0 0.0
    %99 = vmatprep.subr.mxu0 0.0
    %100 = vmatpush1.msra.mxu0 0.0
    %101 = vmatprep.subr.mxu0 0.0
    %102 = vmatpush1.msra.mxu0 0.0
    %103 = vmatprep.subr.mxu0 0.0
    %104 = vmatpush1.msra.mxu0 0.0
    %105 = vmatprep.subr.mxu0 0.0
    %106 = vmatpush1.msra.mxu0 0.0
    %107 = vmatprep.subr.mxu0 0.0
    %108 = vmatpush1.msra.mxu0 0.0
    %109 = vmatprep.subr.mxu0 0.0
    %110 = vmatpush1.msra.mxu0 0.0
    %111 = vmatprep.subr.mxu0 0.0
    %112 = vmatpush1.msra.mxu0 0.0
    %113 = vmatprep.subr.mxu0 0.0
    %114 = vmatpush1.msra.mxu0 0.0
    %115 = vmatprep.subr.mxu0 0.0
    %116 = vmatpush1.msra.mxu0 0.0
    %117 = vmatprep.subr.mxu0 0.0
    %118 = vmatpush1.msra.mxu0 0.0
    %119 = vmatprep.subr.mxu0 0.0
    %120 = vmatpush1.msra.mxu0 0.0
    %121 = vmatprep.subr.mxu0 0.0
    %122 = vmatpush1.msra.mxu0 0.0
    %123 = vmatprep.subr.mxu0 0.0
    %124 = vmatpush1.msra.mxu0 0.0
    %125 = vmatprep.subr.mxu0 0.0
    %126 = vmatpush1.msra.mxu0 0.0
    %127 = vmatprep.subr.mxu0 0.0
    %128 = vmatpush1.msra.mxu0 0.0
    %129 = vmatprep.mubr.f32.mxu0 0.0
    %130 = vmatmul.mubr.f32.gmra.mrb[0].mxu0 %v60
    %v131 = vpop.f32.mrb[0].mxu0
    %v132 = vadd.f32 0.0, %v131
    %v133 = vpop.f32.mrb[0].mxu0
    %134 = vmatprep.mubr.f32.mxu0 0.0
    %135 = vmatmul.mubr.f32.gmra.mrb[0].mxu0 %v63
    %v136 = vpop.f32.mrb[0].mxu0
    %v137 = vadd.f32 0.0, %v136
    %v138 = vpop.f32.mrb[0].mxu0
    %139 = vdwg.mxu0
    %v140 = vadd.f32 %v50, %v132
    %v141 = vadd.f32 %v51, %v137
    %142 = vst.msk [vmem:[#allocation2] sm:$0xff] %vm58, %v140
    %143 = vst.msk [vmem:[#allocation2 + $0x8] sm:$0xff] %vm58, %v141
    // Predicated region
    $region26: #{tpu_custom_call.1} parent=1 // pred_check
      %p144 = pneg %p43
    $region27: #{tpu_custom_call.1} parent=1 // pred_check_branch
      %146 = sbr.rel (%p144) target = $region29
    $region28: #{tpu_custom_call.1} parent=1 // pred_region
      %v147 = vld [vmem:[#allocation2] sm:$0xff]
      %v148 = vld [vmem:[#allocation2 + $0x8] sm:$0xff]
      %v149 = vld [vmem:[%s2] sm:$0x1]
      %v151 = vlaneseq
      %v152 = vshrl.u32 %v151, 7
      %v153 = vsub.s32 0, %v152
      %v154 = vrot.slane %v149, %v153
      %v156 = vadd.f32 %v147, %v154
      %v157 = vadd.f32 %v148, %v154
      %158 = vst.msk [vmem:[#allocation8] sm:$0xff] %vm58, %v156
      %159 = vst.msk [vmem:[#allocation8 + $0x8] sm:$0xff] %vm58, %v157
    $region29: #{tpu_custom_call.1} parent=1 // pred_fallthru
      _
    // Predicated region
    $region30: #{tpu_custom_call.1} parent=1 // pred_check
      _
    $region31: #{tpu_custom_call.1} parent=1 // pred_check_branch
      %161 = sbr.rel (0) target = $region33
    $region32: #{tpu_custom_call.1} parent=1 // pred_region
      %s163 = ssub.s32 256, 256
      %164 = vsyncadd [#allocation5], %s163
      %s165 = sshll.u32 [#allocation8], 4
      %s166 = int_to_ptr.vmem [resolvable:$true] %s165
      %171 = dma.vmem_to_hbm [thread:$0]  %s166, 256, %s3, [#allocation5], 128, 128, 8
    $region33: #{tpu_custom_call.1} parent=1 // pred_fallthru
      _
    // Predicated region
    $region34: #{tpu_custom_call.1} parent=1 // pred_check
      _
    $region35: #{tpu_custom_call.1} parent=1 // pred_check_branch
      %173 = sbr.rel (0) target = $region37
    $region36: #{tpu_custom_call.1} parent=1 // pred_region
      %174 = dma.done [#allocation5], 256
    $region37: #{tpu_custom_call.1} parent=1 // pred_fallthru
      _
    %175 = vsyncpa [#allocation4], 1
    %176 = vsyncpa [#allocation7], 1
    %177 = vsyncpa [#allocation5], 1

</llo_original>
